<compile_context>
chip_gen: v5e
topology: v5e:2x2
jax: 0.10.0
libtpu: 0.0.40
codegen_flags: <defaults>
</compile_context>

<pallas_src>
import functools

import jax
import jax.numpy as jnp
from jax.experimental import pallas as pl
from jax.experimental.pallas import tpu as pltpu

IN_F = 3            # Linear in_features
OUT_F = 6           # Linear out_features
OUT_COLS = (OUT_F - 2) + OUT_F   # 4 (head) + 6 (y) = 10
LANE = 128


def _round_up(n, m):
    return ((n + m - 1) // m) * m


def cat_addmm_kernel(xT_ref, wT_ref, bT_ref, oT_ref):
    # xT_ref: (IN_F, TB)       -- batch on the lane axis (lane-dense)
    # wT_ref: (OUT_COLS, IN_F) -- folded weight, transposed
    # bT_ref: (OUT_COLS, 1)    -- folded bias, transposed
    # oT_ref: (OUT_COLS, TB)
    xT = xT_ref[...]
    wT = wT_ref[...]
    acc = jnp.broadcast_to(bT_ref[...], oT_ref.shape).astype(jnp.float32)
    # K = 3 contraction as unrolled broadcast-FMAs on the VPU (no MXU).
    for k in range(IN_F):
        acc = acc + wT[:, k:k + 1].astype(jnp.float32) * xT[k:k + 1, :].astype(jnp.float32)
    oT_ref[...] = acc.astype(oT_ref.dtype)


@functools.partial(jax.jit, static_argnames=("tile_b",))
def cat_addmm(x, w, b, *, tile_b=512):
    """x: (B, IN_F); w: (IN_F, OUT_F) (already transposed vs torch); b: (1, OUT_F)."""
    B = x.shape[0]

    # --- Fold head + concat into the weights (done once, outside the kernel). ---
    # head = y[:, :1] + y[:, 1:2] + y[:, 2:]  ==  x @ (w0 + w1 + w2:) + (b0 + b1 + b2:)
    w_head = w[:, 0:1] + w[:, 1:2] + w[:, 2:]                 # (IN_F, OUT_F-2)
    b_head = b[:, 0:1] + b[:, 1:2] + b[:, 2:]                 # (1, OUT_F-2)
    w_full = jnp.concatenate([w_head, w], axis=-1)            # (IN_F, OUT_COLS)
    b_full = jnp.concatenate([b_head, b], axis=-1)            # (1, OUT_COLS)

    # --- Transpose so B is the lane axis (lane-dense loads/stores). ---
    xT = x.T                                                  # (IN_F, B)
    wT = w_full.T                                             # (OUT_COLS, IN_F)
    bT = b_full.T                                             # (OUT_COLS, 1)

    # --- Tile the lane (B) axis; pad to a multiple of the tile. ---
    if B <= tile_b:
        TB = _round_up(max(B, 1), LANE)
    else:
        TB = _round_up(tile_b, LANE)
    Bp = _round_up(B, TB)
    if Bp != B:
        xT = jnp.pad(xT, ((0, 0), (0, Bp - B)))
    grid = (Bp // TB,)

    flops = 2 * Bp * IN_F * OUT_COLS
    bytes_accessed = 4 * (Bp * IN_F + OUT_COLS * IN_F + OUT_COLS + Bp * OUT_COLS)

    outT = pl.pallas_call(
        cat_addmm_kernel,
        out_shape=jax.ShapeDtypeStruct((OUT_COLS, Bp), x.dtype),
        grid=grid,
        in_specs=[
            pl.BlockSpec((IN_F, TB), lambda i: (0, i)),
            pl.BlockSpec((OUT_COLS, IN_F), lambda i: (0, 0)),
            pl.BlockSpec((OUT_COLS, 1), lambda i: (0, 0)),
        ],
        out_specs=pl.BlockSpec((OUT_COLS, TB), lambda i: (0, i)),
        compiler_params=pltpu.CompilerParams(
            dimension_semantics=("parallel",),
        ),
        cost_estimate=pl.CostEstimate(
            flops=flops, transcendentals=0, bytes_accessed=bytes_accessed
        ),
    )(xT, wT, bT)

    return outT[:, :B].T                                      # (B, OUT_COLS)


if __name__ == "__main__":
    key = jax.random.PRNGKey(0)
    kx, kw, kb = jax.random.split(key, 3)

    # Shapes implied by the module: x (2, 3), Linear(3 -> 6).
    x = jax.random.normal(kx, (2, IN_F), dtype=jnp.float32)
    # PyTorch Linear weight is (OUT, IN); we keep it transposed as (IN, OUT).
    w = jax.random.uniform(kw, (IN_F, OUT_F), dtype=jnp.float32,
                           minval=-1.0 / jnp.sqrt(IN_F), maxval=1.0 / jnp.sqrt(IN_F))
    b = jax.random.uniform(kb, (1, OUT_F), dtype=jnp.float32,
                           minval=-1.0 / jnp.sqrt(IN_F), maxval=1.0 / jnp.sqrt(IN_F))

    out = cat_addmm(x, w, b)
    jax.block_until_ready(out)

    # Pure-JAX reference (original, unfolded formulation).
    y_ref = x @ w + b
    head_ref = y_ref[:, 0:1] + y_ref[:, 1:2] + y_ref[:, 2:]
    ref = jnp.concatenate([head_ref, y_ref], axis=-1)
    assert out.shape == (2, OUT_COLS), out.shape
    assert jnp.allclose(out, ref, atol=1e-5, rtol=1e-5), (out, ref)

    print("KERNEL_OK")
</pallas_src>

<mosaic_0001>
module attributes {stable_mosaic.version = 11 : i64} {
  func.func @cat_addmm_kernel(%arg0: i32, %arg1: memref<3x128xf32, #tpu.memory_space<vmem>>, %arg2: memref<10x3xf32, #tpu.memory_space<vmem>>, %arg3: memref<10x1xf32, #tpu.memory_space<vmem>>, %arg4: memref<10x128xf32, #tpu.memory_space<vmem>>) attributes {dimension_semantics = [#tpu.dimension_semantics<parallel>], iteration_bounds = array<i64: 1>, scalar_prefetch = 0 : i64, scratch_operands = 0 : i64, tpu.core_type = #tpu.core_type<tc>, window_params = [{transform_indices = @transform_0, window_bounds = array<i64: 3, 128>}, {pipeline_mode = #tpu.pipeline_mode<synchronous>, transform_indices = @transform_1, window_bounds = array<i64: 10, 3>}, {pipeline_mode = #tpu.pipeline_mode<synchronous>, transform_indices = @transform_2, window_bounds = array<i64: 10, 1>}, {transform_indices = @transform_3, window_bounds = array<i64: 10, 128>}]} {
    %c0 = arith.constant 0 : index
    %c0_0 = arith.constant 0 : index
    %0 = vector.load %arg1[%c0, %c0_0] : memref<3x128xf32, #tpu.memory_space<vmem>>, vector<3x128xf32>
    %c0_1 = arith.constant 0 : index
    %c0_2 = arith.constant 0 : index
    %1 = vector.load %arg2[%c0_1, %c0_2] : memref<10x3xf32, #tpu.memory_space<vmem>>, vector<10x3xf32>
    %c0_3 = arith.constant 0 : index
    %c0_4 = arith.constant 0 : index
    %2 = vector.load %arg3[%c0_3, %c0_4] : memref<10x1xf32, #tpu.memory_space<vmem>>, vector<10x1xf32>
    %3 = vector.shape_cast %2 : vector<10x1xf32> to vector<10x1xf32>
    %4 = vector.broadcast %3 : vector<10x1xf32> to vector<10x128xf32>
    %5 = vector.extract_strided_slice %1 {offsets = [0, 0], sizes = [10, 1], strides = [1, 1]} : vector<10x3xf32> to vector<10x1xf32>
    %6 = vector.extract_strided_slice %0 {offsets = [0, 0], sizes = [1, 128], strides = [1, 1]} : vector<3x128xf32> to vector<1x128xf32>
    %7 = vector.broadcast %5 : vector<10x1xf32> to vector<10x128xf32>
    %8 = vector.broadcast %6 : vector<1x128xf32> to vector<10x128xf32>
    %9 = arith.mulf %7, %8 : vector<10x128xf32>
    %10 = arith.addf %4, %9 : vector<10x128xf32>
    %11 = vector.extract_strided_slice %1 {offsets = [0, 1], sizes = [10, 1], strides = [1, 1]} : vector<10x3xf32> to vector<10x1xf32>
    %12 = vector.extract_strided_slice %0 {offsets = [1, 0], sizes = [1, 128], strides = [1, 1]} : vector<3x128xf32> to vector<1x128xf32>
    %13 = vector.broadcast %11 : vector<10x1xf32> to vector<10x128xf32>
    %14 = vector.broadcast %12 : vector<1x128xf32> to vector<10x128xf32>
    %15 = arith.mulf %13, %14 : vector<10x128xf32>
    %16 = arith.addf %10, %15 : vector<10x128xf32>
    %17 = vector.extract_strided_slice %1 {offsets = [0, 2], sizes = [10, 1], strides = [1, 1]} : vector<10x3xf32> to vector<10x1xf32>
    %18 = vector.extract_strided_slice %0 {offsets = [2, 0], sizes = [1, 128], strides = [1, 1]} : vector<3x128xf32> to vector<1x128xf32>
    %19 = vector.broadcast %17 : vector<10x1xf32> to vector<10x128xf32>
    %20 = vector.broadcast %18 : vector<1x128xf32> to vector<10x128xf32>
    %21 = arith.mulf %19, %20 : vector<10x128xf32>
    %22 = arith.addf %16, %21 : vector<10x128xf32>
    %c0_5 = arith.constant 0 : index
    %c0_6 = arith.constant 0 : index
    %23 = vector.load %arg4[%c0_5, %c0_6] : memref<10x128xf32, #tpu.memory_space<vmem>>, vector<10x128xf32>
    tpu.vector_store %arg4[%c0_5, %c0_6], %22 {strides = array<i32>} : memref<10x128xf32, #tpu.memory_space<vmem>>, vector<10x128xf32>,
    return
  }
  func.func @transform_0(%arg0: i32) -> (i32, i32) {
    %c0_i32 = arith.constant 0 : i32
    %c0_i32_0 = arith.constant 0 : i32
    return %c0_i32, %arg0 : i32, i32
  }
  func.func @transform_1(%arg0: i32) -> (i32, i32) {
    %c0_i32 = arith.constant 0 : i32
    %c0_i32_0 = arith.constant 0 : i32
    %c0_i32_1 = arith.constant 0 : i32
    return %c0_i32, %c0_i32_0 : i32, i32
  }
  func.func @transform_2(%arg0: i32) -> (i32, i32) {
    %c0_i32 = arith.constant 0 : i32
    %c0_i32_0 = arith.constant 0 : i32
    %c0_i32_1 = arith.constant 0 : i32
    return %c0_i32, %c0_i32_0 : i32, i32
  }
  func.func @transform_3(%arg0: i32) -> (i32, i32) {
    %c0_i32 = arith.constant 0 : i32
    %c0_i32_0 = arith.constant 0 : i32
    return %c0_i32, %arg0 : i32, i32
  }
}

</mosaic_0001>

<llo_original>
// kernel: cat_addmm.1
$region0: #{cat_addmm.1}
  #allocation0 [shape = 'u32[]', space=smem, size = 0x4, offset = 0x4, fixed_abs, tag = 'smem constant byte address 0x4 - core index']
  #allocation1 [shape = 'u32[72,128]{1,0:T(1,128)}', space=vmem, size = 0x9000, scoped, tag = 'internal scratch']
  %s0 = inlined_call_operand.vmem [shape: f32[3,128], index: 0, kind: input, shape index: {}]
  %s1 = inlined_call_operand.vmem [shape: f32[10,3], index: 1, kind: input, shape index: {}]
  %s2 = inlined_call_operand.vmem [shape: f32[10,1], index: 2, kind: input, shape index: {}]
  %s3 = inlined_call_operand.vmem [shape: f32[10,128], index: 3, kind: output, shape index: {}]
  %s4 = sld [smem:[#allocation0]]
  $region22: #{cat_addmm.1} parent=0
    _
  %s6 = ssub.s32 1, %s4
  %s7 = scalar_select 0, %s6, %s4
  // Predicated region
  $region2: #{cat_addmm.1} parent=0 // pred_check
    _
  $region3: #{cat_addmm.1} parent=0 // pred_check_branch
    %9 = sbr.rel (0) target = $region5
  $region4: #{cat_addmm.1} parent=0 // pred_region
    _
  $region5: #{cat_addmm.1} parent=0 // pred_fallthru
    _
  // Predicated region
  $region6: #{cat_addmm.1} parent=0 // pred_check
    _
  $region7: #{cat_addmm.1} parent=0 // pred_check_branch
    %11 = sbr.rel (0) target = $region9
  $region8: #{cat_addmm.1} parent=0 // pred_region
    _
  $region9: #{cat_addmm.1} parent=0 // pred_fallthru
    _
  // Predicated region
  $region10: #{cat_addmm.1} parent=0 // pred_check
    _
  $region11: #{cat_addmm.1} parent=0 // pred_check_branch
    %13 = sbr.rel (0) target = $region13
  $region12: #{cat_addmm.1} parent=0 // pred_region
    _
  $region13: #{cat_addmm.1} parent=0 // pred_fallthru
    _
  %v14 = vld [vmem:[%s0] sm:$0x7]
  %v15 = vld [vmem:[%s1] sm:$0xff]
  %v16 = vld [vmem:[%s1 + $0x8] sm:$0x3]
  %v17 = vld [vmem:[%s2] sm:$0xff]
  %v18 = vld [vmem:[%s2 + $0x8] sm:$0x3]
  %20 = vset.pattern.permute.xlu0 0
  %21 = vperm.xlu0 %20, %v17
  %v22 = vpop.permute.xlu0 %21
  %25 = vset.pattern.permute.xlu0 0
  %26 = vperm.xlu0 %25, %v18
  %v27 = vpop.permute.xlu0 %26
  %30 = vset.pattern.permute.xlu0 0
  %31 = vperm.xlu0 %30, %v15
  %v32 = vpop.permute.xlu0 %31
  %35 = vset.pattern.permute.xlu0 0
  %36 = vperm.xlu0 %35, %v16
  %v37 = vpop.permute.xlu0 %36
  %v39 = vperm.slane %v14, 0
  %v40 = vmul.f32 %v32, %v39
  %v41 = vmul.f32 %v37, %v39
  %v42 = vadd.f32 %v22, %v40
  %v43 = vadd.f32 %v27, %v41
  %44 = vset.pattern.permute.xlu0 1
  %45 = vperm.xlu0 %44, %v15
  %v46 = vpop.permute.xlu0 %45
  %48 = vset.pattern.permute.xlu0 1
  %49 = vperm.xlu0 %48, %v16
  %v50 = vpop.permute.xlu0 %49
  %v52 = vperm.slane %v14, 1
  %v53 = vmul.f32 %v46, %v52
  %v54 = vmul.f32 %v50, %v52
  %v55 = vadd.f32 %v42, %v53
  %v56 = vadd.f32 %v43, %v54
  %57 = vset.pattern.permute.xlu0 2
  %58 = vperm.xlu0 %57, %v15
  %v59 = vpop.permute.xlu0 %58
  %61 = vset.pattern.permute.xlu0 2
  %62 = vperm.xlu0 %61, %v16
  %v63 = vpop.permute.xlu0 %62
  %v65 = vperm.slane %v14, 2
  %v66 = vmul.f32 %v59, %v65
  %v67 = vmul.f32 %v63, %v65
  %v68 = vadd.f32 %v55, %v66
  %v69 = vadd.f32 %v56, %v67
  %70 = vst [vmem:[%s3] sm:$0xff] %v68
  %71 = vst [vmem:[%s3 + $0x8] sm:$0x3] %v69
  // Predicated region
  $region14: #{cat_addmm.1} parent=0 // pred_check
    _
  $region15: #{cat_addmm.1} parent=0 // pred_check_branch
    %73 = sbr.rel (0) target = $region17
  $region16: #{cat_addmm.1} parent=0 // pred_region
    _
  $region17: #{cat_addmm.1} parent=0 // pred_fallthru
    _
  // Predicated region
  $region18: #{cat_addmm.1} parent=0 // pred_check
    _
  $region19: #{cat_addmm.1} parent=0 // pred_check_branch
    %75 = sbr.rel (0) target = $region21
  $region20: #{cat_addmm.1} parent=0 // pred_region
    _
  $region21: #{cat_addmm.1} parent=0 // pred_fallthru
    _

</llo_original>
